<compile_context>
chip_gen: v5e
topology: v5e:2x2
jax: 0.10.0
libtpu: 0.0.40
codegen_flags: <defaults>
</compile_context>

<pallas_src>
import functools

import jax
import jax.numpy as jnp
from jax import lax
from jax.experimental import pallas as pl
from jax.experimental.pallas import tpu as pltpu

BN_EPS = 1e-5
LANE = 128
SUBLANE = 8


def _round_up(x, m):
    return (x + m - 1) // m * m


def actor_kernel(x_ref, w1_ref, w23_ref, vec_ref, out_ref, *,
                 f1, f1_rows, f2, a_pad, offs):
    """One independent minibatch: x_ref [B,S] -> out_ref [B, A_PAD]."""
    o_b1, o_g, o_b, o_b2, o_b3 = offs
    b1 = vec_ref[:, o_b1:o_b1 + f1]
    gamma = vec_ref[:, o_g:o_g + f1]
    beta = vec_ref[:, o_b:o_b + f1]
    b2 = vec_ref[:, o_b2:o_b2 + f2]
    b3 = vec_ref[:, o_b3:o_b3 + a_pad]

    cdt = w1_ref.dtype                 # matmul operand dtype (f32 or bf16)
    x = x_ref[...]

    # fc1 + relu (f32 accumulation regardless of operand dtype)
    h1 = jnp.dot(x.astype(cdt), w1_ref[...],
                 preferred_element_type=jnp.float32) + b1
    h1 = jnp.maximum(h1, 0.0)                                        # [B, F1]

    # BatchNorm1d, training mode: biased batch stats over the FULL batch of
    # this grid step (B must be >= 2; PyTorch raises at B=1 in training mode).
    inv_b = 1.0 / h1.shape[0]
    mean = jnp.sum(h1, axis=0, keepdims=True) * inv_b                # [1, F1]
    mean_sq = jnp.sum(h1 * h1, axis=0, keepdims=True) * inv_b        # [1, F1]
    var = jnp.maximum(mean_sq - mean * mean, 0.0)                    # clamp: no NaN
    scale = gamma * lax.rsqrt(var + BN_EPS)                          # [1, F1]
    shift = beta - mean * scale                                      # [1, F1]
    h1n = h1 * scale + shift                                         # 2 VPU ops

    # fc2 + relu (w2 is a zero-offset static view into the packed slab)
    w2 = w23_ref[0:f1, 0:f2]
    h2 = jnp.dot(h1n.astype(cdt), w2,
                 preferred_element_type=jnp.float32) + b2
    h2 = jnp.maximum(h2, 0.0)                                        # [B, F2]

    # fc3 + tanh (N lane-padded to 128 -> unmasked lane-dense store)
    w3 = w23_ref[f1_rows:f1_rows + f2, 0:a_pad]
    out = jnp.dot(h2.astype(cdt), w3,
                  preferred_element_type=jnp.float32) + b3
    out_ref[...] = jnp.tanh(out)                                     # [B, A_PAD]


def pack_params(params, weights_dtype=jnp.float32):
    """One-time packing/padding of the Actor parameters.

    * w2 and fc3's weight (zero-padded to 128 output lanes) are fused into a
      single [F1_pad + F2_pad, W23] slab (row split 8-sublane aligned).
    * b1 / gamma / beta / b2 / b3_pad are fused into one [1, total] slab with
      every segment starting on a 128-lane boundary (zero-cost in-kernel views).
    * weights_dtype=jnp.bfloat16 halves weight DMA bytes (v6e/v7x MXU-native);
      BN stats, bias adds and tanh stay f32 inside the kernel.
    """
    F1 = params["w1"].shape[1]
    F2 = params["w2"].shape[1]
    A = params["w3"].shape[1]

    A_PAD = _round_up(max(A, 1), LANE)
    F1_L = _round_up(F1, LANE)
    F2_L = _round_up(F2, LANE)
    F1_R = _round_up(F1, SUBLANE)
    F2_R = _round_up(F2, SUBLANE)
    W23 = max(F2_L, A_PAD)

    # Fused w2 / padded-w3 slab.
    w23 = jnp.zeros((F1_R + F2_R, W23), weights_dtype)
    w23 = w23.at[:F1, :F2].set(params["w2"].astype(weights_dtype))
    w23 = w23.at[F1_R:F1_R + F2, :A].set(params["w3"].astype(weights_dtype))

    # Fused, 128-lane-aligned row-vector slab: [ b1 | gamma | beta | b2 | b3 ].
    def pad_lanes(v, width):
        return jnp.zeros((1, width), jnp.float32).at[:, :v.shape[1]].set(v)

    vec = jnp.concatenate([
        pad_lanes(params["b1"], F1_L),
        pad_lanes(params["gamma"], F1_L),
        pad_lanes(params["beta"], F1_L),
        pad_lanes(params["b2"], F2_L),
        pad_lanes(params["b3"], A_PAD),
    ], axis=1)
    offs = (0, F1_L, 2 * F1_L, 3 * F1_L, 3 * F1_L + F2_L)

    return {
        "w1": params["w1"].astype(weights_dtype),
        "w23": w23,
        "vec": vec,
        "dims": (F1, F1_R, F2, A, A_PAD),
        "offs": offs,
    }


def actor_forward_many(x3, packed, *, vmem_limit_bytes=None):
    """x3: [G, B, state_size] float32 — G independent minibatches (BN stats are
    per minibatch). Returns [G, B, action_size]."""
    G, B, S = x3.shape
    F1, F1_R, F2, A, A_PAD = packed["dims"]
    offs = packed["offs"]
    w1, w23, vec = packed["w1"], packed["w23"], packed["vec"]

    kernel = functools.partial(
        actor_kernel, f1=F1, f1_rows=F1_R, f2=F2, a_pad=A_PAD, offs=offs)

    def resident(a):  # same block every grid step -> stays in VMEM, one DMA
        return pl.BlockSpec(a.shape, lambda g: (0,) * a.ndim)

    weight_bytes = sum(int(a.size) * a.dtype.itemsize for a in (w1, w23, vec))
    flops = 2 * G * B * (S * F1 + F1 * F2 + F2 * A_PAD)
    transcendentals = G * (B * A_PAD + F1)                 # tanh + rsqrt
    bytes_accessed = 4 * (int(x3.size) + G * B * A_PAD) + weight_bytes

    out_pad = pl.pallas_call(
        kernel,
        out_shape=jax.ShapeDtypeStruct((G, B, A_PAD), jnp.float32),
        grid=(G,),
        in_specs=[
            pl.BlockSpec((None, B, S), lambda g: (g, 0, 0)),   # per-step batch
            resident(w1),
            resident(w23),
            resident(vec),
        ],
        out_specs=pl.BlockSpec((None, B, A_PAD), lambda g: (g, 0, 0)),
        compiler_params=pltpu.CompilerParams(
            dimension_semantics=("parallel",),
            vmem_limit_bytes=vmem_limit_bytes),
        cost_estimate=pl.CostEstimate(
            flops=flops, transcendentals=transcendentals,
            bytes_accessed=bytes_accessed),
    )(x3, w1, w23, vec)

    # Lane-dense store in the kernel; trim the tanh(0)=0 padding here.
    return out_pad[..., :A]


def actor_forward(x, packed, *, vmem_limit_bytes=None):
    """x: [B, state_size] float32 — single minibatch (matches Actor.forward)."""
    out = actor_forward_many(x[None], packed, vmem_limit_bytes=vmem_limit_bytes)
    return out[0]


def init_params(key, state_size, action_size, fc1_units=256, fc2_units=128):
    """Deterministic init mirroring Actor.__init__/reset_parameters.

    Weights stored as [in, out] (transpose of PyTorch's [out, in]).
    hidden_init uses weight.size()[0] == out_features, so lim = 1/sqrt(out).
    Biases keep PyTorch Linear default: U(-1/sqrt(in), 1/sqrt(in)).
    BatchNorm1d: gamma=1, beta=0.
    """
    ks = jax.random.split(key, 6)
    u = lambda k, shape, lim: jax.random.uniform(
        k, shape, jnp.float32, minval=-lim, maxval=lim)

    lim1 = 1.0 / jnp.sqrt(fc1_units)
    lim2 = 1.0 / jnp.sqrt(fc2_units)
    return {
        "w1": u(ks[0], (state_size, fc1_units), lim1),
        "b1": u(ks[1], (1, fc1_units), 1.0 / jnp.sqrt(state_size)),
        "w2": u(ks[2], (fc1_units, fc2_units), lim2),
        "b2": u(ks[3], (1, fc2_units), 1.0 / jnp.sqrt(fc1_units)),
        "w3": u(ks[4], (fc2_units, action_size), 3e-3),
        "b3": u(ks[5], (1, action_size), 1.0 / jnp.sqrt(fc2_units)),
        "gamma": jnp.ones((1, fc1_units), jnp.float32),
        "beta": jnp.zeros((1, fc1_units), jnp.float32),
    }


def actor_reference(x, params):
    """Pure-JAX reference for correctness checking (two-pass BN variance)."""
    h1 = jnp.maximum(x @ params["w1"] + params["b1"], 0.0)
    mean = jnp.mean(h1, axis=0, keepdims=True)
    var = jnp.mean((h1 - mean) ** 2, axis=0, keepdims=True)
    h1n = (h1 - mean) * lax.rsqrt(var + BN_EPS) * params["gamma"] + params["beta"]
    h2 = jnp.maximum(h1n @ params["w2"] + params["b2"], 0.0)
    return jnp.tanh(h2 @ params["w3"] + params["b3"])


if __name__ == "__main__":
    STATE_SIZE = 32
    ACTION_SIZE = 4
    BATCH = 8        # full logical batch per BN group (must be >= 2)
    GROUPS = 2       # independent minibatches, gridded in parallel

    key = jax.random.PRNGKey(0)
    k_params, k_x = jax.random.split(key)
    params = init_params(k_params, STATE_SIZE, ACTION_SIZE)
    packed = pack_params(params)            # f32 weights -> exact PyTorch match
    x3 = jax.random.normal(k_x, (GROUPS, BATCH, STATE_SIZE), jnp.float32)

    # Gridded multi-minibatch path.
    out3 = jax.block_until_ready(actor_forward_many(x3, packed))
    assert out3.shape == (GROUPS, BATCH, ACTION_SIZE)
    for g in range(GROUPS):
        ref_g = actor_reference(x3[g], params)
        assert jnp.allclose(out3[g], ref_g, atol=1e-4, rtol=1e-4), "mismatch (grid)"

    # Single-minibatch convenience path (matches Actor.forward exactly).
    out = jax.block_until_ready(actor_forward(x3[0], packed))
    assert out.shape == (BATCH, ACTION_SIZE)
    assert jnp.allclose(out, actor_reference(x3[0], params),
                        atol=1e-4, rtol=1e-4), "mismatch (single)"

    print("KERNEL_OK")
</pallas_src>

<mosaic_0001>
module attributes {stable_mosaic.version = 11 : i64} {
  func.func @actor_kernel(%arg0: i32, %arg1: memref<1x8x32xf32, #tpu.memory_space<vmem>>, %arg2: memref<32x256xf32, #tpu.memory_space<vmem>>, %arg3: memref<384x128xf32, #tpu.memory_space<vmem>>, %arg4: memref<1x1024xf32, #tpu.memory_space<vmem>>, %arg5: memref<1x8x128xf32, #tpu.memory_space<vmem>>) attributes {dimension_semantics = [#tpu.dimension_semantics<parallel>], iteration_bounds = array<i64: 2>, scalar_prefetch = 0 : i64, scratch_operands = 0 : i64, tpu.core_type = #tpu.core_type<tc>, window_params = [{transform_indices = @transform_0, window_bounds = array<i64: 1, 8, 32>}, {pipeline_mode = #tpu.pipeline_mode<synchronous>, transform_indices = @transform_1, window_bounds = array<i64: 32, 256>}, {pipeline_mode = #tpu.pipeline_mode<synchronous>, transform_indices = @transform_2, window_bounds = array<i64: 384, 128>}, {pipeline_mode = #tpu.pipeline_mode<synchronous>, transform_indices = @transform_3, window_bounds = array<i64: 1, 1024>}, {transform_indices = @transform_4, window_bounds = array<i64: 1, 8, 128>}]} {
    %c0 = arith.constant 0 : index
    %c0_0 = arith.constant 0 : index
    %0 = vector.load %arg4[%c0, %c0_0] : memref<1x1024xf32, #tpu.memory_space<vmem>>, vector<1x256xf32>
    %c0_1 = arith.constant 0 : index
    %c256 = arith.constant 256 : index
    %1 = vector.load %arg4[%c0_1, %c256] : memref<1x1024xf32, #tpu.memory_space<vmem>>, vector<1x256xf32>
    %c0_2 = arith.constant 0 : index
    %c512 = arith.constant 512 : index
    %2 = vector.load %arg4[%c0_2, %c512] : memref<1x1024xf32, #tpu.memory_space<vmem>>, vector<1x256xf32>
    %c0_3 = arith.constant 0 : index
    %c768 = arith.constant 768 : index
    %3 = vector.load %arg4[%c0_3, %c768] : memref<1x1024xf32, #tpu.memory_space<vmem>>, vector<1x128xf32>
    %c0_4 = arith.constant 0 : index
    %c896 = arith.constant 896 : index
    %4 = vector.load %arg4[%c0_4, %c896] : memref<1x1024xf32, #tpu.memory_space<vmem>>, vector<1x128xf32>
    %c0_5 = arith.constant 0 : index
    %c0_6 = arith.constant 0 : index
    %c0_7 = arith.constant 0 : index
    %5 = vector.load %arg1[%c0_5, %c0_6, %c0_7] : memref<1x8x32xf32, #tpu.memory_space<vmem>>, vector<1x8x32xf32>
    %6 = vector.shape_cast %5 : vector<1x8x32xf32> to vector<8x32xf32>
    %c0_8 = arith.constant 0 : index
    %c0_9 = arith.constant 0 : index
    %7 = vector.load %arg2[%c0_8, %c0_9] : memref<32x256xf32, #tpu.memory_space<vmem>>, vector<32x256xf32>
    %cst = arith.constant dense<0.000000e+00> : vector<8x256xf32>
    %8 = tpu.matmul %6, %7, %cst {dimension_numbers = #tpu.dot_dimension_numbers<[1], [0], [0], [1], [0, 0, 1, 1], [], []>} : vector<8x32xf32>, vector<32x256xf32>, vector<8x256xf32> -> vector<8x256xf32>
    %9 = vector.broadcast %0 : vector<1x256xf32> to vector<8x256xf32>
    %10 = arith.addf %8, %9 : vector<8x256xf32>
    %cst_10 = arith.constant 0.000000e+00 : f32
    %11 = vector.broadcast %cst_10 : f32 to vector<8x256xf32>
    %12 = arith.maximumf %10, %11 : vector<8x256xf32>
    %cst_11 = arith.constant dense<0.000000e+00> : vector<256xf32>
    %13 = vector.multi_reduction <add>, %12, %cst_11 [0] : vector<8x256xf32> to vector<256xf32>
    %14 = vector.shape_cast %13 : vector<256xf32> to vector<1x256xf32>
    %cst_12 = arith.constant 1.250000e-01 : f32
    %15 = vector.broadcast %cst_12 : f32 to vector<1x256xf32>
    %16 = arith.mulf %14, %15 : vector<1x256xf32>
    %17 = arith.mulf %12, %12 : vector<8x256xf32>
    %cst_13 = arith.constant dense<0.000000e+00> : vector<256xf32>
    %18 = vector.multi_reduction <add>, %17, %cst_13 [0] : vector<8x256xf32> to vector<256xf32>
    %19 = vector.shape_cast %18 : vector<256xf32> to vector<1x256xf32>
    %cst_14 = arith.constant 1.250000e-01 : f32
    %20 = vector.broadcast %cst_14 : f32 to vector<1x256xf32>
    %21 = arith.mulf %19, %20 : vector<1x256xf32>
    %22 = arith.mulf %16, %16 : vector<1x256xf32>
    %23 = arith.subf %21, %22 : vector<1x256xf32>
    %cst_15 = arith.constant 0.000000e+00 : f32
    %24 = vector.broadcast %cst_15 : f32 to vector<1x256xf32>
    %25 = arith.maximumf %23, %24 : vector<1x256xf32>
    %cst_16 = arith.constant 9.99999974E-6 : f32
    %26 = vector.broadcast %cst_16 : f32 to vector<1x256xf32>
    %27 = arith.addf %25, %26 : vector<1x256xf32>
    %28 = math.rsqrt %27 : vector<1x256xf32>
    %29 = arith.mulf %1, %28 : vector<1x256xf32>
    %30 = arith.mulf %16, %29 : vector<1x256xf32>
    %31 = arith.subf %2, %30 : vector<1x256xf32>
    %32 = vector.broadcast %29 : vector<1x256xf32> to vector<8x256xf32>
    %33 = arith.mulf %12, %32 : vector<8x256xf32>
    %34 = vector.broadcast %31 : vector<1x256xf32> to vector<8x256xf32>
    %35 = arith.addf %33, %34 : vector<8x256xf32>
    %c0_17 = arith.constant 0 : index
    %c0_18 = arith.constant 0 : index
    %36 = vector.load %arg3[%c0_17, %c0_18] : memref<384x128xf32, #tpu.memory_space<vmem>>, vector<256x128xf32>
    %cst_19 = arith.constant dense<0.000000e+00> : vector<8x128xf32>
    %37 = tpu.matmul %35, %36, %cst_19 {dimension_numbers = #tpu.dot_dimension_numbers<[1], [0], [0], [1], [0, 0, 1, 1], [], []>} : vector<8x256xf32>, vector<256x128xf32>, vector<8x128xf32> -> vector<8x128xf32>
    %38 = vector.broadcast %3 : vector<1x128xf32> to vector<8x128xf32>
    %39 = arith.addf %37, %38 : vector<8x128xf32>
    %cst_20 = arith.constant 0.000000e+00 : f32
    %40 = vector.broadcast %cst_20 : f32 to vector<8x128xf32>
    %41 = arith.maximumf %39, %40 : vector<8x128xf32>
    %c256_21 = arith.constant 256 : index
    %c0_22 = arith.constant 0 : index
    %42 = vector.load %arg3[%c256_21, %c0_22] : memref<384x128xf32, #tpu.memory_space<vmem>>, vector<128x128xf32>
    %cst_23 = arith.constant dense<0.000000e+00> : vector<8x128xf32>
    %43 = tpu.matmul %41, %42, %cst_23 {dimension_numbers = #tpu.dot_dimension_numbers<[1], [0], [0], [1], [0, 0, 1, 1], [], []>} : vector<8x128xf32>, vector<128x128xf32>, vector<8x128xf32> -> vector<8x128xf32>
    %44 = vector.broadcast %4 : vector<1x128xf32> to vector<8x128xf32>
    %45 = arith.addf %43, %44 : vector<8x128xf32>
    %46 = math.tanh %45 : vector<8x128xf32>
    %c0_24 = arith.constant 0 : index
    %c0_25 = arith.constant 0 : index
    %c0_26 = arith.constant 0 : index
    %47 = vector.load %arg5[%c0_24, %c0_25, %c0_26] : memref<1x8x128xf32, #tpu.memory_space<vmem>>, vector<1x8x128xf32>
    %48 = vector.shape_cast %47 : vector<1x8x128xf32> to vector<8x128xf32>
    %49 = vector.shape_cast %46 : vector<8x128xf32> to vector<1x8x128xf32>
    tpu.vector_store %arg5[%c0_24, %c0_25, %c0_26], %49 {strides = array<i32>} : memref<1x8x128xf32, #tpu.memory_space<vmem>>, vector<1x8x128xf32>,
    return
  }
  func.func @transform_0(%arg0: i32) -> (i32, i32, i32) {
    %c0_i32 = arith.constant 0 : i32
    %c0_i32_0 = arith.constant 0 : i32
    %c0_i32_1 = arith.constant 0 : i32
    return %arg0, %c0_i32, %c0_i32_0 : i32, i32, i32
  }
  func.func @transform_1(%arg0: i32) -> (i32, i32) {
    %c0_i32 = arith.constant 0 : i32
    %c0_i32_0 = arith.constant 0 : i32
    %c0_i32_1 = arith.constant 0 : i32
    return %c0_i32, %c0_i32_0 : i32, i32
  }
  func.func @transform_2(%arg0: i32) -> (i32, i32) {
    %c0_i32 = arith.constant 0 : i32
    %c0_i32_0 = arith.constant 0 : i32
    %c0_i32_1 = arith.constant 0 : i32
    return %c0_i32, %c0_i32_0 : i32, i32
  }
  func.func @transform_3(%arg0: i32) -> (i32, i32) {
    %c0_i32 = arith.constant 0 : i32
    %c0_i32_0 = arith.constant 0 : i32
    %c0_i32_1 = arith.constant 0 : i32
    return %c0_i32, %c0_i32_0 : i32, i32
  }
  func.func @transform_4(%arg0: i32) -> (i32, i32, i32) {
    %c0_i32 = arith.constant 0 : i32
    %c0_i32_0 = arith.constant 0 : i32
    %c0_i32_1 = arith.constant 0 : i32
    return %arg0, %c0_i32, %c0_i32_0 : i32, i32, i32
  }
}

</mosaic_0001>

<llo_original>
// kernel: tpu_custom_call.1
$region0: #{tpu_custom_call.1}
  #allocation0 [shape = 'u32[]', space=smem, size = 0x4, offset = 0x4, fixed_abs, tag = 'smem constant byte address 0x4 - core index']
  #allocation1 [shape = 'u32[72,128]{1,0:T(1,128)}', space=vmem, size = 0x9000, scoped, tag = 'internal scratch']
  %s0 = inlined_call_operand.hbm [shape: f32[2,8,32], index: 0, kind: input, shape index: {}]
  %s1 = inlined_call_operand.hbm [shape: f32[32,256], index: 1, kind: input, shape index: {}]
  %s2 = inlined_call_operand.hbm [shape: f32[384,128], index: 2, kind: input, shape index: {}]
  %s3 = inlined_call_operand.hbm [shape: f32[1,1024], index: 3, kind: input, shape index: {}]
  %s4 = inlined_call_operand.hbm [shape: f32[2,8,128], index: 4, kind: output, shape index: {}]
  %s5 = sld [smem:[#allocation0]]
  $region65: #{tpu_custom_call.1} parent=0
    _
  %s7 = ssub.s32 1, %s5
  %s8 = scalar_select 0, %s7, %s5
  $region1: #{tpu_custom_call.1} parent=0
    #allocation2 [shape = 'u8[8192]{0}', space=vmem, size = 0x2000, scoped, tag = 'input window, operand 0']
    #allocation3 [shape = 's32[2]{0}', space=sflag, size = 0x8, scoped, tag = 'scoped memory for tpu_custom_call.1']
    #allocation4 [shape = 's32[2]{0}', space=sflag, size = 0x8, scoped, tag = 'scoped memory for tpu_custom_call.1']
    #allocation5 [shape = 'u8[32768]{0}', space=vmem, size = 0x8000, scoped, tag = 'input window, operand 1, single buffered']
    #allocation6 [shape = 's32[1]{0}', space=sflag, size = 0x4, scoped, tag = 'scoped memory for tpu_custom_call.1']
    #allocation7 [shape = 'u8[196608]{0}', space=vmem, size = 0x30000, scoped, tag = 'input window, operand 2, single buffered']
    #allocation8 [shape = 'u8[4096]{0}', space=vmem, size = 0x1000, scoped, tag = 'input window, operand 3, single buffered']
    #allocation9 [shape = 's32[1]{0}', space=sflag, size = 0x4, scoped, tag = 'scoped memory for tpu_custom_call.1']
    #allocation10 [shape = 'u8[8192]{0}', space=vmem, size = 0x2000, scoped, tag = 'output window, operand 0']
    %9 = vsyncpa [#allocation3], 0
    %s10 = scalar_lea.sflag [#allocation3], 1
    %11 = vsyncpa %s10, 0
    %12 = vsyncpa [#allocation6], 0
    %13 = vsyncpa [#allocation9], 0
    %14 = vsyncpa [#allocation4], 0
    %s15 = scalar_lea.sflag [#allocation4], 1
    %16 = vsyncpa %s15, 0
    loop: start=0, step=1, limit=4
    $region2: #{tpu_custom_call.1} parent=1 // loop_pre_header
      _
    $region3: #{tpu_custom_call.1} parent=1 // loop_header
      %s18 = sphi 0, %s22
      %p19 = scmp.ge.s32.totalorder %s18, 4
      %s28 = sphi 0, %s30
      %s31 = sphi 0, %s28
      %s32 = sphi 0, %s31
      %s48 = sphi 0, %s32
      %s52 = sphi 0, %s52
      %s54 = sphi 0, %s52
      %s55 = sphi 0, %s54
      %s69 = sphi 0, %s55
      %s73 = sphi 0, %s73
      %s75 = sphi 0, %s73
      %s76 = sphi 0, %s75
      %s90 = sphi 0, %s76
      %s94 = sphi 0, %s94
      %s96 = sphi 0, %s94
      %s97 = sphi 0, %s96
      %s111 = sphi 0, %s97
      %s117 = sphi 0, %s119
      %s120 = sphi 0, %s117
      %s121 = sphi 0, %s120
      %s137 = sphi 0, %s121
    $region4: #{tpu_custom_call.1} parent=1 // loop_header_branch
      %21 = sbr.rel (%p19) target = $region8
    $region5: #{tpu_custom_call.1} parent=1 // loop_body
      %s23 = ssub.s32 %s18, 1
      %s24 = ssub.s32 %s18, 2
      %s25 = sadd.s32 %s18, 1
      %s26 = ssub.s32 %s18, %s25
      %p27 = scmp.eq.s32.totalorder %s26, 0
      %s29 = sadd.s32 %s28, 1
      %s30 = scalar_select %p27, %s28, %s29
      %p33 = pneg %p27
      %p34 = scmp.eq.s32.totalorder %s18, 1
      %p35 = por %p33, %p34
      %p36 = scmp.ne.s32.totalorder %s28, %s31
      %p37 = scmp.eq.s32.totalorder %s18, 0
      %p38 = por %p36, %p37
      %p39 = scmp.ne.s32.totalorder %s28, %s31
      %p40 = scmp.eq.s32.totalorder %s23, 1
      %p41 = por %p39, %p40
      %p42 = scmp.ne.s32.totalorder %s31, %s32
      %p43 = scmp.eq.s32.totalorder %s23, 0
      %p44 = por %p42, %p43
      %p45 = scmp.ne.s32.totalorder %s31, %s32
      %p46 = scmp.eq.s32.totalorder %s24, 1
      %p47 = por %p45, %p46
      %p49 = scmp.ne.s32.totalorder %s32, %s48
      %p50 = scmp.eq.s32.totalorder %s24, 0
      %p51 = por %p49, %p50
      %s53 = sadd.s32 %s52, 1
      %p56 = scmp.eq.s32.totalorder %s18, 1
      %p57 = scmp.ne.s32.totalorder %s52, %s54
      %p58 = scmp.eq.s32.totalorder %s18, 0
      %p59 = por %p57, %p58
      %p60 = scmp.ne.s32.totalorder %s52, %s54
      %p61 = scmp.eq.s32.totalorder %s23, 1
      %p62 = por %p60, %p61
      %p63 = scmp.ne.s32.totalorder %s54, %s55
      %p64 = scmp.eq.s32.totalorder %s23, 0
      %p65 = por %p63, %p64
      %p66 = scmp.ne.s32.totalorder %s54, %s55
      %p67 = scmp.eq.s32.totalorder %s24, 1
      %p68 = por %p66, %p67
      %p70 = scmp.ne.s32.totalorder %s55, %s69
      %p71 = scmp.eq.s32.totalorder %s24, 0
      %p72 = por %p70, %p71
      %s74 = sadd.s32 %s73, 1
      %p77 = scmp.eq.s32.totalorder %s18, 1
      %p78 = scmp.ne.s32.totalorder %s73, %s75
      %p79 = scmp.eq.s32.totalorder %s18, 0
      %p80 = por %p78, %p79
      %p81 = scmp.ne.s32.totalorder %s73, %s75
      %p82 = scmp.eq.s32.totalorder %s23, 1
      %p83 = por %p81, %p82
      %p84 = scmp.ne.s32.totalorder %s75, %s76
      %p85 = scmp.eq.s32.totalorder %s23, 0
      %p86 = por %p84, %p85
      %p87 = scmp.ne.s32.totalorder %s75, %s76
      %p88 = scmp.eq.s32.totalorder %s24, 1
      %p89 = por %p87, %p88
      %p91 = scmp.ne.s32.totalorder %s76, %s90
      %p92 = scmp.eq.s32.totalorder %s24, 0
      %p93 = por %p91, %p92
      %s95 = sadd.s32 %s94, 1
      %p98 = scmp.eq.s32.totalorder %s18, 1
      %p99 = scmp.ne.s32.totalorder %s94, %s96
      %p100 = scmp.eq.s32.totalorder %s18, 0
      %p101 = por %p99, %p100
      %p102 = scmp.ne.s32.totalorder %s94, %s96
      %p103 = scmp.eq.s32.totalorder %s23, 1
      %p104 = por %p102, %p103
      %p105 = scmp.ne.s32.totalorder %s96, %s97
      %p106 = scmp.eq.s32.totalorder %s23, 0
      %p107 = por %p105, %p106
      %p108 = scmp.ne.s32.totalorder %s96, %s97
      %p109 = scmp.eq.s32.totalorder %s24, 1
      %p110 = por %p108, %p109
      %p112 = scmp.ne.s32.totalorder %s97, %s111
      %p113 = scmp.eq.s32.totalorder %s24, 0
      %p114 = por %p112, %p113
      %s115 = ssub.s32 %s18, %s25
      %p116 = scmp.eq.s32.totalorder %s115, 0
      %s118 = sadd.s32 %s117, 1
      %s119 = scalar_select %p116, %s117, %s118
      %p122 = pneg %p116
      %p123 = scmp.eq.s32.totalorder %s18, 1
      %p124 = por %p122, %p123
      %p125 = scmp.ne.s32.totalorder %s117, %s120
      %p126 = scmp.eq.s32.totalorder %s18, 0
      %p127 = por %p125, %p126
      %p128 = scmp.ne.s32.totalorder %s117, %s120
      %p129 = scmp.eq.s32.totalorder %s23, 1
      %p130 = por %p128, %p129
      %p131 = scmp.ne.s32.totalorder %s120, %s121
      %p132 = scmp.eq.s32.totalorder %s23, 0
      %p133 = por %p131, %p132
      %p134 = scmp.ne.s32.totalorder %s120, %s121
      %p135 = scmp.eq.s32.totalorder %s24, 1
      %p136 = por %p134, %p135
      %p138 = scmp.ne.s32.totalorder %s121, %s137
      %p139 = scmp.eq.s32.totalorder %s24, 0
      %p140 = por %p138, %p139
      %p141 = scmp.le.s32.totalorder 1, %s18
      %p142 = scmp.lt.s32.totalorder %s18, 3
      %p143 = pnand %p141, %p142
      %p144 = pneg %p143
      // Predicated region
      $region9: #{tpu_custom_call.1} parent=5 // pred_check
        _
      $region10: #{tpu_custom_call.1} parent=5 // pred_check_branch
        %146 = sbr.rel (%p143) target = $region12
      $region11: #{tpu_custom_call.1} parent=5 // pred_region
        %s147 = ssub.s32 %s18, 1
        // Predicated region
        $region13: #{tpu_custom_call.1} parent=11 // pred_check
          %p148 = pneg %p65
        $region14: #{tpu_custom_call.1} parent=11 // pred_check_branch
          %150 = sbr.rel (%p148) target = $region16
        $region15: #{tpu_custom_call.1} parent=11 // pred_region
          %152 = vsyncadd [#allocation6], 0
          %s153 = sshll.u32 %s1, 4
          %s154 = int_to_ptr.hbm [resolvable:$true] %s153
          %s155 = sshll.u32 [#allocation5], 4
          %s156 = int_to_ptr.vmem [resolvable:$true] %s155
          %161 = dma.hbm_to_vmem [thread:$0]  %s154, 1024, %s156, [#allocation6], 256, 256, 16
        $region16: #{tpu_custom_call.1} parent=11 // pred_fallthru
          _
        // Predicated region
        $region17: #{tpu_custom_call.1} parent=11 // pred_check
          %p162 = pneg %p86
        $region18: #{tpu_custom_call.1} parent=11 // pred_check_branch
          %164 = sbr.rel (%p162) target = $region20
        $region19: #{tpu_custom_call.1} parent=11 // pred_region
          %166 = vsyncadd [#allocation6], 0
          %s167 = sshll.u32 %s2, 4
          %s168 = int_to_ptr.hbm [resolvable:$true] %s167
          %s169 = sshll.u32 [#allocation7], 4
          %s170 = int_to_ptr.vmem [resolvable:$true] %s169
          %175 = dma.hbm_to_vmem [thread:$0]  %s168, 6144, %s170, [#allocation6], 128, 128, 8
        $region20: #{tpu_custom_call.1} parent=11 // pred_fallthru
          _
        // Predicated region
        $region21: #{tpu_custom_call.1} parent=11 // pred_check
          %p176 = pneg %p107
        $region22: #{tpu_custom_call.1} parent=11 // pred_check_branch
          %178 = sbr.rel (%p176) target = $region24
        $region23: #{tpu_custom_call.1} parent=11 // pred_region
          %180 = vsyncadd [#allocation9], 0
          %s182 = sshll.u32 %s3, 4
          %s183 = int_to_ptr.hbm [resolvable:$true] %s182
          %s184 = sshll.u32 [#allocation8], 4
          %s185 = int_to_ptr.vmem [resolvable:$true] %s184
          %187 = dma.hbm_to_vmem [thread:$0]  %s183, 128, %s185, [#allocation9]
        $region24: #{tpu_custom_call.1} parent=11 // pred_fallthru
          _
      $region12: #{tpu_custom_call.1} parent=5 // pred_fallthru
        _
      %p188 = scmp.lt.s32.totalorder %s18, 2
      // Predicated region
      $region25: #{tpu_custom_call.1} parent=5 // pred_check
        %p189 = pneg %p188
      $region26: #{tpu_custom_call.1} parent=5 // pred_check_branch
        %191 = sbr.rel (%p189) target = $region28
      $region27: #{tpu_custom_call.1} parent=5 // pred_region
        // Predicated region
        $region29: #{tpu_custom_call.1} parent=27 // pred_check
          %p192 = pneg %p38
        $region30: #{tpu_custom_call.1} parent=27 // pred_check_branch
          %194 = sbr.rel (%p192) target = $region32
        $region31: #{tpu_custom_call.1} parent=27 // pred_region
          %s195 = sand.u32 %s28, 1
          %s196 = scalar_lea.sflag [#allocation3], %s195
          %s197 = sand.u32 %s28, 1
          %s198 = smul.addr %s197, 8
          %s199 = scalar_lea.vmem [#allocation2], %s198
          %201 = vsyncadd %s196, 0
          %s202 = smul.addr %s18, 8
          %s203 = scalar_lea.hbm %s0, %s202
          %s205 = sshll.u32 %s203, 4
          %s206 = int_to_ptr.hbm [resolvable:$true] %s205
          %s207 = sshll.u32 %s199, 4
          %s208 = int_to_ptr.vmem [resolvable:$true] %s207
          %210 = dma.hbm_to_vmem [thread:$0]  %s206, 128, %s208, %s196
        $region32: #{tpu_custom_call.1} parent=27 // pred_fallthru
          _
      $region28: #{tpu_custom_call.1} parent=5 // pred_fallthru
        _
      %p211 = scmp.le.s32.totalorder 1, %s18
      %p212 = scmp.lt.s32.totalorder %s18, 3
      %p213 = pnand %p211, %p212
      %p214 = pneg %p213
      // Predicated region
      $region33: #{tpu_custom_call.1} parent=5 // pred_check
        _
      $region34: #{tpu_custom_call.1} parent=5 // pred_check_branch
        %216 = sbr.rel (%p213) target = $region36
      $region35: #{tpu_custom_call.1} parent=5 // pred_region
        %s217 = ssub.s32 %s18, 1
        %s218 = sand.u32 %s31, 1
        %s219 = scalar_lea.sflag [#allocation3], %s218
        %s220 = sand.u32 %s31, 1
        %s221 = smul.addr %s220, 8
        %s222 = scalar_lea.vmem [#allocation2], %s221
        // Predicated region
        $region37: #{tpu_custom_call.1} parent=35 // pred_check
          %p223 = pneg %p44
        $region38: #{tpu_custom_call.1} parent=35 // pred_check_branch
          %225 = sbr.rel (%p223) target = $region40
        $region39: #{tpu_custom_call.1} parent=35 // pred_region
          %227 = dma.done %s219, 128
        $region40: #{tpu_custom_call.1} parent=35 // pred_fallthru
          _
        // Predicated region
        $region41: #{tpu_custom_call.1} parent=35 // pred_check
          %p228 = pneg %p65
        $region42: #{tpu_custom_call.1} parent=35 // pred_check_branch
          %230 = sbr.rel (%p228) target = $region44
        $region43: #{tpu_custom_call.1} parent=35 // pred_region
          %232 = dma.done [#allocation6], 1024
        $region44: #{tpu_custom_call.1} parent=35 // pred_fallthru
          _
        // Predicated region
        $region45: #{tpu_custom_call.1} parent=35 // pred_check
          %p233 = pneg %p86
        $region46: #{tpu_custom_call.1} parent=35 // pred_check_branch
          %235 = sbr.rel (%p233) target = $region48
        $region47: #{tpu_custom_call.1} parent=35 // pred_region
          %237 = dma.done [#allocation6], 6144
        $region48: #{tpu_custom_call.1} parent=35 // pred_fallthru
          _
        // Predicated region
        $region49: #{tpu_custom_call.1} parent=35 // pred_check
          %p238 = pneg %p107
        $region50: #{tpu_custom_call.1} parent=35 // pred_check_branch
          %240 = sbr.rel (%p238) target = $region52
        $region51: #{tpu_custom_call.1} parent=35 // pred_region
          %242 = dma.done [#allocation9], 128
        $region52: #{tpu_custom_call.1} parent=35 // pred_fallthru
          _
        %s243 = sand.u32 %s31, 1
        %s244 = scalar_lea.sflag [#allocation3], %s243
        %s245 = sand.u32 %s31, 1
        %s246 = smul.addr %s245, 8
        %s247 = scalar_lea.vmem [#allocation2], %s246
        %p248 = pneg %p44
        %p249 = pneg %p41
        %p250 = pneg %p65
        %p251 = pneg %p62
        %p252 = pneg %p86
        %p253 = pneg %p83
        %p254 = pneg %p107
        %p255 = pneg %p104
        %p256 = pneg %p133
        %p257 = pneg %p130
        %s258 = sand.u32 %s120, 1
        %s259 = scalar_lea.sflag [#allocation4], %s258
        %s260 = sand.u32 %s120, 1
        %s261 = smul.addr %s260, 8
        %s262 = scalar_lea.vmem [#allocation10], %s261
        %v263 = vld [vmem:[#allocation8] sm:$0x3]
        %v264 = vld [vmem:[#allocation8 + $0x2] sm:$0x3]
        %v265 = vld [vmem:[#allocation8 + $0x4] sm:$0x3]
        %v266 = vld [vmem:[#allocation8 + $0x6] sm:$0x1]
        %v267 = vld [vmem:[#allocation8 + $0x7] sm:$0x1]
        %v268 = vld [vmem:[%s222] sm:$0xff]
        %v269 = vld [vmem:[#allocation5] sm:$0xff]
        %v270 = vld [vmem:[#allocation5 + $0x8] sm:$0xff]
        %v271 = vld [vmem:[#allocation5 + $0x10] sm:$0xff]
        %v272 = vld [vmem:[#allocation5 + $0x18] sm:$0xff]
        %v273 = vld [vmem:[#allocation5 + $0x20] sm:$0xff]
        %v274 = vld [vmem:[#allocation5 + $0x28] sm:$0xff]
        %v275 = vld [vmem:[#allocation5 + $0x30] sm:$0xff]
        %v276 = vld [vmem:[#allocation5 + $0x38] sm:$0xff]
        %v278 = vperm.slane %v263, 0
        %v279 = vperm.slane %v263, 1
        %vm282 = vcmask 261120
        %v284 = vsel %vm282, %v268, 0
        %286 = vmatpush.msra.mxu0 0.0
        %287 = vmatpush.msra.mxu0 0.0
        %288 = vmatpush.msra.mxu0 0.0
        %289 = vmatpush.msra.mxu0 0.0
        %290 = vmatpush.msra.mxu0 0.0
        %291 = vmatpush.msra.mxu0 0.0
        %292 = vmatpush.msra.mxu0 0.0
        %293 = vmatpush.msra.mxu0 0.0
        %294 = vmatpush.msra.mxu0 0.0
        %295 = vmatpush.msra.mxu0 0.0
        %296 = vmatpush.msra.mxu0 0.0
        %297 = vmatpush.msra.mxu0 0.0
        %298 = vmatpush.msra.mxu0 %v275
        %299 = vmatpush.msra.mxu0 %v273
        %300 = vmatpush.msra.mxu0 %v271
        %301 = vmatpush.msra.mxu0 %v269
        %302 = vmatmul.f32.gmra.mxu0 %v284
        %v303 = vpop.f32.mrf.mxu0
        %v304 = vadd.f32 %v278, %v303
        %305 = vdwg.mxu0
        %306 = vmatpush.msra.mxu0 0.0
        %307 = vmatpush.msra.mxu0 0.0
        %308 = vmatpush.msra.mxu0 0.0
        %309 = vmatpush.msra.mxu0 0.0
        %310 = vmatpush.msra.mxu0 0.0
        %311 = vmatpush.msra.mxu0 0.0
        %312 = vmatpush.msra.mxu0 0.0
        %313 = vmatpush.msra.mxu0 0.0
        %314 = vmatpush.msra.mxu0 0.0
        %315 = vmatpush.msra.mxu0 0.0
        %316 = vmatpush.msra.mxu0 0.0
        %317 = vmatpush.msra.mxu0 0.0
        %318 = vmatpush.msra.mxu0 %v276
        %319 = vmatpush.msra.mxu0 %v274
        %320 = vmatpush.msra.mxu0 %v272
        %321 = vmatpush.msra.mxu0 %v270
        %322 = vmatmul.f32.gmra.mxu0 %v284
        %v323 = vpop.f32.mrf.mxu0
        %v324 = vadd.f32 %v279, %v323
        %325 = vdwg.mxu0
        %v326 = vmax.f32 %v304, 0.0
        %v327 = vmax.f32 %v324, 0.0
        %v328 = vrot.slane %v326, 4
        %v329 = vadd.f32 %v326, %v328
        %v330 = vrot.slane %v329, 2
        %v331 = vadd.f32 %v329, %v330
        %v332 = vrot.slane %v331, 1
        %v333 = vadd.f32 %v331, %v332
        %v334 = vrot.slane %v327, 4
        %v335 = vadd.f32 %v327, %v334
        %v336 = vrot.slane %v335, 2
        %v337 = vadd.f32 %v335, %v336
        %v338 = vrot.slane %v337, 1
        %v339 = vadd.f32 %v337, %v338
        %v340 = vmul.f32 %v333, 0.125
        %v341 = vmul.f32 %v339, 0.125
        %v342 = vmul.f32 %v326, %v326
        %v343 = vmul.f32 %v327, %v327
        %v344 = vrot.slane %v342, 4
        %v345 = vadd.f32 %v342, %v344
        %v346 = vrot.slane %v345, 2
        %v347 = vadd.f32 %v345, %v346
        %v348 = vrot.slane %v347, 1
        %v349 = vadd.f32 %v347, %v348
        %v350 = vrot.slane %v343, 4
        %v351 = vadd.f32 %v343, %v350
        %v352 = vrot.slane %v351, 2
        %v353 = vadd.f32 %v351, %v352
        %v354 = vrot.slane %v353, 1
        %v355 = vadd.f32 %v353, %v354
        %v356 = vmul.f32 %v349, 0.125
        %v357 = vmul.f32 %v355, 0.125
        %v358 = vmul.f32 %v340, %v340
        %v359 = vmul.f32 %v341, %v341
        %v360 = vsub.f32 %v356, %v358
        %v361 = vsub.f32 %v357, %v359
        %v362 = vmax.f32 %v360, 0.0
        %v363 = vmax.f32 %v361, 0.0
        %v364 = vadd.f32 %v362, 1e-05
        %v365 = vadd.f32 %v363, 1e-05
        %v366 = vrsqrt.pop %v364
        %v367 = vmul.f32 %v366, %v364
        %v368 = vmul.f32 %v367, %v366
        %v369 = vmul.f32 0.5, %v368
        %v370 = vsub.f32 1.5, %v369
        %v371 = vmul.f32 %v366, %v370
        %vm372 = vweird.f32 %v364
        %vm373 = vweird.f32 %v366
        %vm374 = vmor %vm372, %vm373
        %v375 = vsel %vm374, %v366, %v371
        %v376 = vrsqrt.pop %v365
        %v377 = vmul.f32 %v376, %v365
        %v378 = vmul.f32 %v377, %v376
        %v379 = vmul.f32 0.5, %v378
        %v380 = vsub.f32 1.5, %v379
        %v381 = vmul.f32 %v376, %v380
        %vm382 = vweird.f32 %v365
        %vm383 = vweird.f32 %v376
        %vm384 = vmor %vm382, %vm383
        %v385 = vsel %vm384, %v376, %v381
        %v388 = vrot.slane %v385, 7
        %vm389 = vcmask 1040384
        %v390 = vsel %vm389, %v375, %v388
        %v392 = vmul.f32 %v264, %v390
        %v394 = vperm.slane %v392, 0
        %v395 = vperm.slane %v392, 1
        %v398 = vmul.f32 %v340, %v394
        %v399 = vmul.f32 %v341, %v395
        %v402 = vrot.slane %v399, 7
        %v403 = vsel %vm389, %v398, %v402
        %v405 = vsub.f32 %v265, %v403
        %v406 = vmul.f32 %v326, %v394
        %v407 = vmul.f32 %v327, %v395
        %v409 = vperm.slane %v405, 0
        %v410 = vperm.slane %v405, 1
        %v413 = vadd.f32 %v406, %v409
        %v414 = vadd.f32 %v407, %v410
        %v415 = vld [vmem:[#allocation7] sm:$0xff]
        %v416 = vld [vmem:[#allocation7 + $0x8] sm:$0xff]
        %v417 = vld [vmem:[#allocation7 + $0x10] sm:$0xff]
        %v418 = vld [vmem:[#allocation7 + $0x18] sm:$0xff]
        %v419 = vld [vmem:[#allocation7 + $0x20] sm:$0xff]
        %v420 = vld [vmem:[#allocation7 + $0x28] sm:$0xff]
        %v421 = vld [vmem:[#allocation7 + $0x30] sm:$0xff]
        %v422 = vld [vmem:[#allocation7 + $0x38] sm:$0xff]
        %v423 = vld [vmem:[#allocation7 + $0x40] sm:$0xff]
        %v424 = vld [vmem:[#allocation7 + $0x48] sm:$0xff]
        %v425 = vld [vmem:[#allocation7 + $0x50] sm:$0xff]
        %v426 = vld [vmem:[#allocation7 + $0x58] sm:$0xff]
        %v427 = vld [vmem:[#allocation7 + $0x60] sm:$0xff]
        %v428 = vld [vmem:[#allocation7 + $0x68] sm:$0xff]
        %v429 = vld [vmem:[#allocation7 + $0x70] sm:$0xff]
        %v430 = vld [vmem:[#allocation7 + $0x78] sm:$0xff]
        %v431 = vld [vmem:[#allocation7 + $0x80] sm:$0xff]
        %v432 = vld [vmem:[#allocation7 + $0x88] sm:$0xff]
        %v433 = vld [vmem:[#allocation7 + $0x90] sm:$0xff]
        %v434 = vld [vmem:[#allocation7 + $0x98] sm:$0xff]
        %v435 = vld [vmem:[#allocation7 + $0xa0] sm:$0xff]
        %v436 = vld [vmem:[#allocation7 + $0xa8] sm:$0xff]
        %v437 = vld [vmem:[#allocation7 + $0xb0] sm:$0xff]
        %v438 = vld [vmem:[#allocation7 + $0xb8] sm:$0xff]
        %v439 = vld [vmem:[#allocation7 + $0xc0] sm:$0xff]
        %v440 = vld [vmem:[#allocation7 + $0xc8] sm:$0xff]
        %v441 = vld [vmem:[#allocation7 + $0xd0] sm:$0xff]
        %v442 = vld [vmem:[#allocation7 + $0xd8] sm:$0xff]
        %v443 = vld [vmem:[#allocation7 + $0xe0] sm:$0xff]
        %v444 = vld [vmem:[#allocation7 + $0xe8] sm:$0xff]
        %v445 = vld [vmem:[#allocation7 + $0xf0] sm:$0xff]
        %v446 = vld [vmem:[#allocation7 + $0xf8] sm:$0xff]
        %v448 = vperm.slane %v266, 0
        %450 = vmatpush.msra.mxu0 %v430
        %451 = vmatpush.msra.mxu0 %v429
        %452 = vmatpush.msra.mxu0 %v428
        %453 = vmatpush.msra.mxu0 %v427
        %454 = vmatpush.msra.mxu0 %v426
        %455 = vmatpush.msra.mxu0 %v425
        %456 = vmatpush.msra.mxu0 %v424
        %457 = vmatpush.msra.mxu0 %v423
        %458 = vmatpush.msra.mxu0 %v422
        %459 = vmatpush.msra.mxu0 %v421
        %460 = vmatpush.msra.mxu0 %v420
        %461 = vmatpush.msra.mxu0 %v419
        %462 = vmatpush.msra.mxu0 %v418
        %463 = vmatpush.msra.mxu0 %v417
        %464 = vmatpush.msra.mxu0 %v416
        %465 = vmatpush.msra.mxu0 %v415
        %466 = vmatmul.f32.gmra.mxu0 %v413
        %v467 = vpop.f32.mrf.mxu0
        %v468 = vadd.f32 %v448, %v467
        %469 = vdwg.mxu0
        %470 = vmatpush.msra.mxu0 %v446
        %471 = vmatpush.msra.mxu0 %v445
        %472 = vmatpush.msra.mxu0 %v444
        %473 = vmatpush.msra.mxu0 %v443
        %474 = vmatpush.msra.mxu0 %v442
        %475 = vmatpush.msra.mxu0 %v441
        %476 = vmatpush.msra.mxu0 %v440
        %477 = vmatpush.msra.mxu0 %v439
        %478 = vmatpush.msra.mxu0 %v438
        %479 = vmatpush.msra.mxu0 %v437
        %480 = vmatpush.msra.mxu0 %v436
        %481 = vmatpush.msra.mxu0 %v435
        %482 = vmatpush.msra.mxu0 %v434
        %483 = vmatpush.msra.mxu0 %v433
        %484 = vmatpush.msra.mxu0 %v432
        %485 = vmatpush.msra.mxu0 %v431
        %486 = vmatmul.f32.gmra.mxu0 %v414
        %v487 = vpop.f32.mrf.mxu0
        %v488 = vadd.f32 %v468, %v487
        %489 = vdwg.mxu0
        %v490 = vmax.f32 %v488, 0.0
        %v491 = vld [vmem:[#allocation7 + $0x100] sm:$0xff]
        %v492 = vld [vmem:[#allocation7 + $0x108] sm:$0xff]
        %v493 = vld [vmem:[#allocation7 + $0x110] sm:$0xff]
        %v494 = vld [vmem:[#allocation7 + $0x118] sm:$0xff]
        %v495 = vld [vmem:[#allocation7 + $0x120] sm:$0xff]
        %v496 = vld [vmem:[#allocation7 + $0x128] sm:$0xff]
        %v497 = vld [vmem:[#allocation7 + $0x130] sm:$0xff]
        %v498 = vld [vmem:[#allocation7 + $0x138] sm:$0xff]
        %v499 = vld [vmem:[#allocation7 + $0x140] sm:$0xff]
        %v500 = vld [vmem:[#allocation7 + $0x148] sm:$0xff]
        %v501 = vld [vmem:[#allocation7 + $0x150] sm:$0xff]
        %v502 = vld [vmem:[#allocation7 + $0x158] sm:$0xff]
        %v503 = vld [vmem:[#allocation7 + $0x160] sm:$0xff]
        %v504 = vld [vmem:[#allocation7 + $0x168] sm:$0xff]
        %v505 = vld [vmem:[#allocation7 + $0x170] sm:$0xff]
        %v506 = vld [vmem:[#allocation7 + $0x178] sm:$0xff]
        %v508 = vperm.slane %v267, 0
        %510 = vmatpush.msra.mxu0 %v506
        %511 = vmatpush.msra.mxu0 %v505
        %512 = vmatpush.msra.mxu0 %v504
        %513 = vmatpush.msra.mxu0 %v503
        %514 = vmatpush.msra.mxu0 %v502
        %515 = vmatpush.msra.mxu0 %v501
        %516 = vmatpush.msra.mxu0 %v500
        %517 = vmatpush.msra.mxu0 %v499
        %518 = vmatpush.msra.mxu0 %v498
        %519 = vmatpush.msra.mxu0 %v497
        %520 = vmatpush.msra.mxu0 %v496
        %521 = vmatpush.msra.mxu0 %v495
        %522 = vmatpush.msra.mxu0 %v494
        %523 = vmatpush.msra.mxu0 %v493
        %524 = vmatpush.msra.mxu0 %v492
        %525 = vmatpush.msra.mxu0 %v491
        %526 = vmatmul.f32.gmra.mxu0 %v490
        %v527 = vpop.f32.mrf.mxu0
        %v528 = vadd.f32 %v508, %v527
        %529 = vdwg.mxu0
        %v530 = vtanh.pop %v528
        %531 = vst [vmem:[%s262] sm:$0xff] %v530
        %s532 = sand.u32 %s120, 1
        %s533 = scalar_lea.sflag [#allocation4], %s532
        %s534 = sand.u32 %s120, 1
        %s535 = smul.addr %s534, 8
        %s536 = scalar_lea.vmem [#allocation10], %s535
        // Predicated region
        $region53: #{tpu_custom_call.1} parent=35 // pred_check
          %p537 = pneg %p130
        $region54: #{tpu_custom_call.1} parent=35 // pred_check_branch
          %539 = sbr.rel (%p537) target = $region56
        $region55: #{tpu_custom_call.1} parent=35 // pred_region
          %541 = vsyncadd %s533, 0
          %s542 = smul.addr %s23, 8
          %s543 = scalar_lea.hbm %s4, %s542
          %s545 = sshll.u32 %s536, 4
          %s546 = int_to_ptr.vmem [resolvable:$true] %s545
          %s547 = sshll.u32 %s543, 4
          %s548 = int_to_ptr.hbm [resolvable:$true] %s547
          %550 = dma.vmem_to_hbm [thread:$0]  %s546, 128, %s548, %s533
        $region56: #{tpu_custom_call.1} parent=35 // pred_fallthru
          _
      $region36: #{tpu_custom_call.1} parent=5 // pred_fallthru
        _
      %p551 = scmp.le.s32.totalorder 2, %s18
      // Predicated region
      $region57: #{tpu_custom_call.1} parent=5 // pred_check
        %p552 = pneg %p551
      $region58: #{tpu_custom_call.1} parent=5 // pred_check_branch
        %554 = sbr.rel (%p552) target = $region60
      $region59: #{tpu_custom_call.1} parent=5 // pred_region
        %s555 = ssub.s32 %s18, 2
        // Predicated region
        $region61: #{tpu_custom_call.1} parent=59 // pred_check
          %p556 = pneg %p136
        $region62: #{tpu_custom_call.1} parent=59 // pred_check_branch
          %558 = sbr.rel (%p556) target = $region64
        $region63: #{tpu_custom_call.1} parent=59 // pred_region
          %s559 = sand.u32 %s121, 1
          %s560 = scalar_lea.sflag [#allocation4], %s559
          %s561 = sand.u32 %s121, 1
          %s562 = smul.addr %s561, 8
          %s563 = scalar_lea.vmem [#allocation10], %s562
          %565 = dma.done %s560, 128
        $region64: #{tpu_custom_call.1} parent=59 // pred_fallthru
          _
      $region60: #{tpu_custom_call.1} parent=5 // pred_fallthru
        _
    $region6: #{tpu_custom_call.1} parent=1 // loop_footer
      %s22 = sadd.s32 1, %s18
    $region7: #{tpu_custom_call.1} parent=1 // loop_footer_branch
      %17 = sbr.rel target = $region3
    $region8: #{tpu_custom_call.1} parent=1 // loop_exit
      _
    %566 = vsyncpa [#allocation3], 1
    %s567 = scalar_lea.sflag [#allocation3], 1
    %568 = vsyncpa %s567, 1
    %569 = vsyncpa [#allocation6], 1
    %570 = vsyncpa [#allocation9], 1
    %571 = vsyncpa [#allocation4], 1
    %s572 = scalar_lea.sflag [#allocation4], 1
    %573 = vsyncpa %s572, 1

</llo_original>
